<compile_context>
chip_gen: v7x
topology: tpu7x:2x2x1
jax: 0.10.0
libtpu: 0.0.40
codegen_flags: <defaults>
</compile_context>

<pallas_src>
import jax
import jax.numpy as jnp
from jax.experimental import pallas as pl
from jax.experimental.pallas import tpu as pltpu

LANES = 128
ACC_ROWS = 512          # fixed accumulator height: 512*128*4 B = 0.25 MiB per acc
EPS = 0.0001


def _chip_config():
    """Return (num_tensorcores, input-tile byte budget) for this TPU generation."""
    try:
        kind = jax.devices()[0].device_kind.lower()
    except Exception:
        kind = ""
    if "v7" in kind or "tpu7" in kind or "tpu 7" in kind:
        return 2, 4 * 1024 * 1024      # 2 TCs/chip, ~3.2 TB/s HBM, 64 MiB VMEM
    if "v6" in kind or "tpu6" in kind or "tpu 6" in kind:
        return 1, 4 * 1024 * 1024      # 1 TC/chip, ~1.4 TB/s HBM, 128 MiB VMEM
    return 1, 1 * 1024 * 1024          # v5e / unknown: conservative (16 MiB scoped default)


def _make_dice_kernel(tile_r, acc_rows, n_sub, tiles_per_core, num_tiles, rows,
                      ragged):
    """Build the kernel with all tiling parameters baked in statically."""

    def kernel(p_ref, t_ref, o_ref, acc_pt, acc_sum):
        c = pl.program_id(0)   # per-TensorCore axis ("parallel")
        j = pl.program_id(1)   # reduction axis ("arbitrary")

        @pl.when(j == 0)
        def _init():
            acc_pt[...] = jnp.zeros_like(acc_pt)
            acc_sum[...] = jnp.zeros_like(acc_sum)

        def accumulate(masked, blk=None):
            # Pure-VPU folding of the input tile into two fixed-height f32
            # accumulators, using static sub-slices; one RMW per acc per step.
            if masked:
                base = blk * tile_r
                row_id = jax.lax.broadcasted_iota(jnp.int32, (acc_rows, LANES), 0)
            pt_tot = None
            sm_tot = None
            for s in range(n_sub):
                lo = s * acc_rows
                ps = p_ref[lo:lo + acc_rows, :].astype(jnp.float32)
                ts = t_ref[lo:lo + acc_rows, :].astype(jnp.float32)
                if masked:
                    valid = (row_id + (base + lo)) < rows
                    ps = jnp.where(valid, ps, 0.0)
                    ts = jnp.where(valid, ts, 0.0)
                pt = ps * ts
                sm = ps + ts
                pt_tot = pt if pt_tot is None else pt_tot + pt
                sm_tot = sm if sm_tot is None else sm_tot + sm
            acc_pt[...] += pt_tot
            acc_sum[...] += sm_tot

        if ragged:
            # Un-clamped logical tile index; tiles past num_tiles-1 are clamped
            # duplicates in the index_map and get fully zeroed by the mask.
            blk = c * tiles_per_core + j
            edge = blk >= num_tiles - 1   # partial last tile or clamped duplicate

            @pl.when(edge)
            def _masked():
                accumulate(True, blk)

            @pl.when(jnp.logical_not(edge))
            def _plain():
                accumulate(False)
        else:
            accumulate(False)

        @pl.when(j == tiles_per_core - 1)
        def _finalize():   # single cross-lane/sublane reduce per core
            inter = jnp.sum(acc_pt[...])
            s_sum = jnp.sum(acc_sum[...])      # = sum(pred) + sum(target)
            row = jax.lax.broadcasted_iota(jnp.int32, (8, LANES), 0)
            o_ref[...] = jnp.where(row == 0, inter,
                                   jnp.where(row == 1, s_sum, 0.0))

    return kernel


def dice_loss(pred, target):
    """Pallas equivalent of DiceLoss.forward(pred, target)."""
    assert pred.shape == target.shape
    p = jnp.ravel(pred)
    t = jnp.ravel(target)
    n = p.shape[0]

    # Only pad to a multiple of 128 lanes (zeros are neutral for the sums).
    rem = n % LANES
    if rem:
        pad = LANES - rem
        p = jnp.pad(p, (0, pad))
        t = jnp.pad(t, (0, pad))
    rows = p.shape[0] // LANES
    p2 = p.reshape(rows, LANES)
    t2 = t.reshape(rows, LANES)

    num_cores, tile_bytes = _chip_config()
    bytes_per_row = LANES * jnp.dtype(p2.dtype).itemsize
    tile_r_cap = max(ACC_ROWS, (tile_bytes // bytes_per_row) // ACC_ROWS * ACC_ROWS)

    if rows <= ACC_ROWS:
        tile_r = rows            # single tile, full extent
        acc_rows = rows
    else:
        acc_rows = ACC_ROWS
        # Multiple of ACC_ROWS, never larger than the array's row extent.
        tile_r = min(tile_r_cap, (rows // ACC_ROWS) * ACC_ROWS)
    n_sub = tile_r // acc_rows
    num_tiles = -(-rows // tile_r)
    num_cores = min(num_cores, num_tiles)        # no dead pass for tiny inputs
    tiles_per_core = -(-num_tiles // num_cores)
    ragged = (num_tiles * tile_r != rows) or (num_cores * tiles_per_core != num_tiles)

    # Clamp block index so DMAs never address past the array; clamped
    # (duplicate) tiles are zeroed in-kernel via the un-clamped logical index.
    def in_map(c, j):
        return (jnp.minimum(c * tiles_per_core + j, num_tiles - 1), 0)

    kernel = _make_dice_kernel(tile_r, acc_rows, n_sub, tiles_per_core,
                               num_tiles, rows, ragged)

    parts = pl.pallas_call(
        kernel,
        out_shape=jax.ShapeDtypeStruct((num_cores * 8, LANES), jnp.float32),
        grid_spec=pltpu.PrefetchScalarGridSpec(
            num_scalar_prefetch=0,
            grid=(num_cores, tiles_per_core),
            in_specs=[
                pl.BlockSpec((tile_r, LANES), in_map),
                pl.BlockSpec((tile_r, LANES), in_map),
            ],
            out_specs=pl.BlockSpec((8, LANES), lambda c, j: (c, 0)),
            scratch_shapes=[pltpu.VMEM((acc_rows, LANES), jnp.float32)
                            for _ in range(2)],
        ),
        compiler_params=pltpu.CompilerParams(
            dimension_semantics=("parallel", "arbitrary"),
        ),
    )(p2, t2)

    # Combine per-core partials and apply the loss formula (a few scalars).
    parts3 = parts.reshape(num_cores, 8, LANES)
    intersection = parts3[:, 0, 0].sum()
    union_sum = parts3[:, 1, 0].sum()            # sum(pred) + sum(target)

    union = union_sum + EPS                      # PyTorch adds eps here...
    return -(2.0 * intersection + EPS) / (union + EPS)  # ...and again (matches source)


if __name__ == "__main__":
    def reference(pred, target):
        inter = jnp.sum(pred.astype(jnp.float32) * target.astype(jnp.float32))
        union = jnp.sum(pred.astype(jnp.float32)) + jnp.sum(target.astype(jnp.float32)) + EPS
        return -(2.0 * inter + EPS) / (union + EPS)

    key = jax.random.PRNGKey(0)
    k1, k2, k3, k4 = jax.random.split(key, 4)

    # Primary small test: NCHW = (2, 4, 16, 16), as the PyTorch module expects.
    pred = jax.nn.sigmoid(jax.random.normal(k1, (2, 4, 16, 16), dtype=jnp.float32))
    target = (jax.random.uniform(k2, (2, 4, 16, 16)) > 0.5).astype(jnp.float32)

    loss = dice_loss(pred, target)
    jax.block_until_ready(loss)
    ref = reference(pred, target)
    assert jnp.allclose(loss, ref, rtol=1e-4, atol=1e-6), (loss, ref)

    # Second check exercising multi-tile accumulation, chunked accumulators,
    # the gated ragged mask and (on v7x) the two-core split.
    pred2 = jax.nn.sigmoid(jax.random.normal(k3, (2, 4, 260, 260), dtype=jnp.float32))
    target2 = (jax.random.uniform(k4, (2, 4, 260, 260)) > 0.5).astype(jnp.float32)
    loss2 = dice_loss(pred2, target2)
    jax.block_until_ready(loss2)
    ref2 = reference(pred2, target2)
    assert jnp.allclose(loss2, ref2, rtol=1e-4, atol=1e-6), (loss2, ref2)

    print("KERNEL_OK")
</pallas_src>

<mosaic_0001>
module attributes {stable_mosaic.version = 11 : i64} {
  func.func @kernel(%arg0: i32, %arg1: i32, %arg2: memref<16x128xf32, #tpu.memory_space<vmem>>, %arg3: memref<16x128xf32, #tpu.memory_space<vmem>>, %arg4: memref<8x128xf32, #tpu.memory_space<vmem>>, %arg5: memref<16x128xf32, #tpu.memory_space<vmem>>, %arg6: memref<16x128xf32, #tpu.memory_space<vmem>>) attributes {dimension_semantics = [#tpu.dimension_semantics<parallel>, #tpu.dimension_semantics<arbitrary>], iteration_bounds = array<i64: 1, 1>, scalar_prefetch = 0 : i64, scratch_operands = 2 : i64, tpu.core_type = #tpu.core_type<tc>, window_params = [{transform_indices = @transform_0, window_bounds = array<i64: 16, 128>}, {transform_indices = @transform_1, window_bounds = array<i64: 16, 128>}, {transform_indices = @transform_2, window_bounds = array<i64: 8, 128>}]} {
    %c0_i32 = arith.constant 0 : i32
    %0 = arith.cmpi eq, %arg1, %c0_i32 : i32
    %1 = arith.extui %0 : i1 to i32
    %c0_i32_0 = arith.constant 0 : i32
    %2 = arith.cmpi ne, %1, %c0_i32_0 : i32
    scf.if %2 {
      %cst = arith.constant 0.000000e+00 : f32
      %16 = vector.broadcast %cst : f32 to vector<16x128xf32>
      %c0_14 = arith.constant 0 : index
      %c0_15 = arith.constant 0 : index
      %17 = vector.load %arg5[%c0_14, %c0_15] : memref<16x128xf32, #tpu.memory_space<vmem>>, vector<16x128xf32>
      tpu.vector_store %arg5[%c0_14, %c0_15], %16 {strides = array<i32>} : memref<16x128xf32, #tpu.memory_space<vmem>>, vector<16x128xf32>,
      %cst_16 = arith.constant 0.000000e+00 : f32
      %18 = vector.broadcast %cst_16 : f32 to vector<16x128xf32>
      %c0_17 = arith.constant 0 : index
      %c0_18 = arith.constant 0 : index
      %19 = vector.load %arg6[%c0_17, %c0_18] : memref<16x128xf32, #tpu.memory_space<vmem>>, vector<16x128xf32>
      tpu.vector_store %arg6[%c0_17, %c0_18], %18 {strides = array<i32>} : memref<16x128xf32, #tpu.memory_space<vmem>>, vector<16x128xf32>,
    } else {
    }
    %c0 = arith.constant 0 : index
    %c0_1 = arith.constant 0 : index
    %3 = vector.load %arg2[%c0, %c0_1] : memref<16x128xf32, #tpu.memory_space<vmem>>, vector<16x128xf32>
    %c0_2 = arith.constant 0 : index
    %c0_3 = arith.constant 0 : index
    %4 = vector.load %arg3[%c0_2, %c0_3] : memref<16x128xf32, #tpu.memory_space<vmem>>, vector<16x128xf32>
    %5 = arith.mulf %3, %4 : vector<16x128xf32>
    %6 = arith.addf %3, %4 : vector<16x128xf32>
    %c0_4 = arith.constant 0 : index
    %c0_5 = arith.constant 0 : index
    %7 = vector.load %arg5[%c0_4, %c0_5] : memref<16x128xf32, #tpu.memory_space<vmem>>, vector<16x128xf32>
    %8 = arith.addf %7, %5 : vector<16x128xf32>
    %c0_6 = arith.constant 0 : index
    %c0_7 = arith.constant 0 : index
    %9 = vector.load %arg5[%c0_6, %c0_7] : memref<16x128xf32, #tpu.memory_space<vmem>>, vector<16x128xf32>
    tpu.vector_store %arg5[%c0_6, %c0_7], %8 {strides = array<i32>} : memref<16x128xf32, #tpu.memory_space<vmem>>, vector<16x128xf32>,
    %c0_8 = arith.constant 0 : index
    %c0_9 = arith.constant 0 : index
    %10 = vector.load %arg6[%c0_8, %c0_9] : memref<16x128xf32, #tpu.memory_space<vmem>>, vector<16x128xf32>
    %11 = arith.addf %10, %6 : vector<16x128xf32>
    %c0_10 = arith.constant 0 : index
    %c0_11 = arith.constant 0 : index
    %12 = vector.load %arg6[%c0_10, %c0_11] : memref<16x128xf32, #tpu.memory_space<vmem>>, vector<16x128xf32>
    tpu.vector_store %arg6[%c0_10, %c0_11], %11 {strides = array<i32>} : memref<16x128xf32, #tpu.memory_space<vmem>>, vector<16x128xf32>,
    %c0_i32_12 = arith.constant 0 : i32
    %13 = arith.cmpi eq, %arg1, %c0_i32_12 : i32
    %14 = arith.extui %13 : i1 to i32
    %c0_i32_13 = arith.constant 0 : i32
    %15 = arith.cmpi ne, %14, %c0_i32_13 : i32
    scf.if %15 {
      %c0_14 = arith.constant 0 : index
      %c0_15 = arith.constant 0 : index
      %16 = vector.load %arg5[%c0_14, %c0_15] : memref<16x128xf32, #tpu.memory_space<vmem>>, vector<16x128xf32>
      %17 = vector.shape_cast %16 : vector<16x128xf32> to vector<1x16x128xf32>
      %cst = arith.constant dense<0.000000e+00> : vector<1xf32>
      %18 = vector.multi_reduction <add>, %17, %cst [1, 2] : vector<1x16x128xf32> to vector<1xf32>
      %19 = vector.shape_cast %18 : vector<1xf32> to vector<1x1x1xf32>
      %20 = vector.extract %19[0, 0, 0] : f32 from vector<1x1x1xf32>
      %c0_16 = arith.constant 0 : index
      %c0_17 = arith.constant 0 : index
      %21 = vector.load %arg6[%c0_16, %c0_17] : memref<16x128xf32, #tpu.memory_space<vmem>>, vector<16x128xf32>
      %22 = vector.shape_cast %21 : vector<16x128xf32> to vector<1x16x128xf32>
      %cst_18 = arith.constant dense<0.000000e+00> : vector<1xf32>
      %23 = vector.multi_reduction <add>, %22, %cst_18 [1, 2] : vector<1x16x128xf32> to vector<1xf32>
      %24 = vector.shape_cast %23 : vector<1xf32> to vector<1x1x1xf32>
      %25 = vector.extract %24[0, 0, 0] : f32 from vector<1x1x1xf32>
      %26 = tpu.iota {dimensions = array<i32: 0>} : vector<8x128xi32>
      %c0_i32_19 = arith.constant 0 : i32
      %27 = vector.broadcast %c0_i32_19 : i32 to vector<8x128xi32>
      %28 = arith.cmpi eq, %26, %27 : vector<8x128xi32>
      %c1_i32 = arith.constant 1 : i32
      %29 = vector.broadcast %c1_i32 : i32 to vector<8x128xi32>
      %30 = arith.cmpi eq, %26, %29 : vector<8x128xi32>
      %cst_20 = arith.constant 0.000000e+00 : f32
      %31 = vector.broadcast %25 : f32 to vector<8x128xf32>
      %32 = vector.broadcast %cst_20 : f32 to vector<8x128xf32>
      %33 = arith.select %30, %31, %32 : vector<8x128xi1>, vector<8x128xf32>
      %34 = vector.broadcast %20 : f32 to vector<8x128xf32>
      %35 = arith.select %28, %34, %33 : vector<8x128xi1>, vector<8x128xf32>
      %c0_21 = arith.constant 0 : index
      %c0_22 = arith.constant 0 : index
      %36 = vector.load %arg4[%c0_21, %c0_22] : memref<8x128xf32, #tpu.memory_space<vmem>>, vector<8x128xf32>
      tpu.vector_store %arg4[%c0_21, %c0_22], %35 {strides = array<i32>} : memref<8x128xf32, #tpu.memory_space<vmem>>, vector<8x128xf32>,
    } else {
    }
    return
  }
  func.func @transform_0(%arg0: i32, %arg1: i32) -> (i32, i32) {
    %c1_i32 = arith.constant 1 : i32
    %0 = arith.muli %arg0, %c1_i32 : i32
    %1 = arith.addi %0, %arg1 : i32
    %c0_i32 = arith.constant 0 : i32
    %2 = arith.minsi %1, %c0_i32 : i32
    %c0_i32_0 = arith.constant 0 : i32
    %c0_i32_1 = arith.constant 0 : i32
    return %2, %c0_i32_0 : i32, i32
  }
  func.func @transform_1(%arg0: i32, %arg1: i32) -> (i32, i32) {
    %c1_i32 = arith.constant 1 : i32
    %0 = arith.muli %arg0, %c1_i32 : i32
    %1 = arith.addi %0, %arg1 : i32
    %c0_i32 = arith.constant 0 : i32
    %2 = arith.minsi %1, %c0_i32 : i32
    %c0_i32_0 = arith.constant 0 : i32
    %c0_i32_1 = arith.constant 0 : i32
    return %2, %c0_i32_0 : i32, i32
  }
  func.func @transform_2(%arg0: i32, %arg1: i32) -> (i32, i32) {
    %c0_i32 = arith.constant 0 : i32
    %c0_i32_0 = arith.constant 0 : i32
    return %arg0, %c0_i32 : i32, i32
  }
}

</mosaic_0001>

<llo_original>
// kernel: tpu_custom_call.1
$region0: #{tpu_custom_call.1}
  #allocation0 [shape = 'u32[]', space=smem, size = 0x4, offset = 0x4, fixed_abs, tag = 'smem constant byte address 0x4 - core index']
  #allocation1 [shape = 'u32[144,128]{1,0:T(1,128)}', space=vmem, size = 0x12000, scoped, tag = 'internal scratch']
  #allocation2 [shape = 'f32[16,128]{1,0:T(8,128)}', space=vmem, size = 0x2000, scoped, tag = 'scratch operand']
  #allocation3 [shape = 'f32[16,128]{1,0:T(8,128)}', space=vmem, size = 0x2000, scoped, tag = 'scratch operand']
  %s0 = inlined_call_operand.hbm [shape: f32[16,128], index: 0, kind: input, shape index: {}]
  %s1 = inlined_call_operand.hbm [shape: f32[16,128], index: 1, kind: input, shape index: {}]
  %s2 = inlined_call_operand.hbm [shape: f32[8,128], index: 2, kind: output, shape index: {}]
  %s3 = sld [smem:[#allocation0]]
  $region34: #{tpu_custom_call.1} parent=0
    _
  %s5 = ssub.s32 1, %s3
  %s6 = scalar_select 0, %s5, %s3
  $region1: #{tpu_custom_call.1} parent=0
    #allocation4 [shape = 'u8[8192]{0}', space=vmem, size = 0x2000, scoped, tag = 'input window, operand 0, single buffered']
    #allocation5 [shape = 's32[1]{0}', space=sflag, size = 0x4, scoped, tag = 'scoped memory for tpu_custom_call.1']
    #allocation6 [shape = 's32[1]{0}', space=sflag, size = 0x4, scoped, tag = 'scoped memory for tpu_custom_call.1']
    #allocation7 [shape = 'u8[8192]{0}', space=vmem, size = 0x2000, scoped, tag = 'input window, operand 1, single buffered']
    #allocation8 [shape = 's32[1]{0}', space=sflag, size = 0x4, scoped, tag = 'scoped memory for tpu_custom_call.1']
    #allocation9 [shape = 'u8[4096]{0}', space=vmem, size = 0x1000, scoped, tag = 'output window, operand 0, single buffered']
    %7 = vsyncpa [#allocation5], 0
    %8 = vsyncpa [#allocation8], 0
    %9 = vsyncpa [#allocation6], 0
    // Predicated region
    $region2: #{tpu_custom_call.1} parent=1 // pred_check
      _
    $region3: #{tpu_custom_call.1} parent=1 // pred_check_branch
      %11 = sbr.rel (0) target = $region5
    $region4: #{tpu_custom_call.1} parent=1 // pred_region
      %s12 = sadd.s32 0, 0
      %p13 = scmp.lt.s32.totalorder %s12, 0
      %s14 = scalar_select %p13, %s12, 0
      %s15 = smul.u32 2, %s14
      %s17 = ssub.s32 256, 256
      %18 = vsyncadd [#allocation5], %s17
      %s19 = smul.addr %s15, 128
      %s20 = scalar_lea.hbm %s0, %s19
      %s21 = sshll.u32 [#allocation4], 4
      %s22 = int_to_ptr.vmem [resolvable:$true] %s21
      %27 = dma.hbm_to_vmem [thread:$0]  %s20, 256, %s22, [#allocation5], 128, 128, 8
    $region5: #{tpu_custom_call.1} parent=1 // pred_fallthru
      _
    // Predicated region
    $region6: #{tpu_custom_call.1} parent=1 // pred_check
      _
    $region7: #{tpu_custom_call.1} parent=1 // pred_check_branch
      %29 = sbr.rel (0) target = $region9
    $region8: #{tpu_custom_call.1} parent=1 // pred_region
      %s30 = sadd.s32 0, 0
      %p31 = scmp.lt.s32.totalorder %s30, 0
      %s32 = scalar_select %p31, %s30, 0
      %s33 = smul.u32 2, %s32
      %s35 = ssub.s32 256, 256
      %36 = vsyncadd [#allocation8], %s35
      %s37 = smul.addr %s33, 128
      %s38 = scalar_lea.hbm %s1, %s37
      %s39 = sshll.u32 [#allocation7], 4
      %s40 = int_to_ptr.vmem [resolvable:$true] %s39
      %45 = dma.hbm_to_vmem [thread:$0]  %s38, 256, %s40, [#allocation8], 128, 128, 8
    $region9: #{tpu_custom_call.1} parent=1 // pred_fallthru
      _
    // Predicated region
    $region10: #{tpu_custom_call.1} parent=1 // pred_check
      _
    $region11: #{tpu_custom_call.1} parent=1 // pred_check_branch
      %47 = sbr.rel (0) target = $region13
    $region12: #{tpu_custom_call.1} parent=1 // pred_region
      %48 = dma.done [#allocation5], 256
    $region13: #{tpu_custom_call.1} parent=1 // pred_fallthru
      _
    // Predicated region
    $region14: #{tpu_custom_call.1} parent=1 // pred_check
      _
    $region15: #{tpu_custom_call.1} parent=1 // pred_check_branch
      %50 = sbr.rel (0) target = $region17
    $region16: #{tpu_custom_call.1} parent=1 // pred_region
      %51 = dma.done [#allocation8], 256
    $region17: #{tpu_custom_call.1} parent=1 // pred_fallthru
      _
    %s52 = sadd.s32 0, 0
    %p53 = scmp.lt.s32.totalorder %s52, 0
    %s54 = scalar_select %p53, %s52, 0
    %s55 = smul.u32 2, %s54
    %s56 = sadd.s32 0, 0
    %p57 = scmp.lt.s32.totalorder %s56, 0
    %s58 = scalar_select %p57, %s56, 0
    %s59 = smul.u32 2, %s58
    %p60 = scmp.eq.s32.totalorder 0, 0
    // Predicated region
    $region18: #{tpu_custom_call.1} parent=1 // pred_check
      %p61 = pneg %p60
    $region19: #{tpu_custom_call.1} parent=1 // pred_check_branch
      %63 = sbr.rel (%p61) target = $region21
    $region20: #{tpu_custom_call.1} parent=1 // pred_region
      %64 = vst [vmem:[#allocation2] sm:$0xff] 0.0
      %65 = vst [vmem:[#allocation2 + $0x8] sm:$0xff] 0.0
      %66 = vst [vmem:[#allocation3] sm:$0xff] 0.0
      %67 = vst [vmem:[#allocation3 + $0x8] sm:$0xff] 0.0
    $region21: #{tpu_custom_call.1} parent=1 // pred_fallthru
      _
    %v68 = vld [vmem:[#allocation4] sm:$0xff]
    %v69 = vld [vmem:[#allocation4 + $0x8] sm:$0xff]
    %v70 = vld [vmem:[#allocation7] sm:$0xff]
    %v71 = vld [vmem:[#allocation7 + $0x8] sm:$0xff]
    %v72 = vmul.f32 %v68, %v70
    %v73 = vmul.f32 %v69, %v71
    %v74 = vadd.f32 %v68, %v70
    %v75 = vadd.f32 %v69, %v71
    %v76 = vld [vmem:[#allocation2] sm:$0xff]
    %v77 = vld [vmem:[#allocation2 + $0x8] sm:$0xff]
    %v78 = vadd.f32 %v76, %v72
    %v79 = vadd.f32 %v77, %v73
    %80 = vst [vmem:[#allocation2] sm:$0xff] %v78
    %81 = vst [vmem:[#allocation2 + $0x8] sm:$0xff] %v79
    %v82 = vld [vmem:[#allocation3] sm:$0xff]
    %v83 = vld [vmem:[#allocation3 + $0x8] sm:$0xff]
    %v84 = vadd.f32 %v82, %v74
    %v85 = vadd.f32 %v83, %v75
    %86 = vst [vmem:[#allocation3] sm:$0xff] %v84
    %87 = vst [vmem:[#allocation3 + $0x8] sm:$0xff] %v85
    // Predicated region
    $region22: #{tpu_custom_call.1} parent=1 // pred_check
      %p88 = pneg %p60
    $region23: #{tpu_custom_call.1} parent=1 // pred_check_branch
      %90 = sbr.rel (%p88) target = $region25
    $region24: #{tpu_custom_call.1} parent=1 // pred_region
      %v91 = vld [vmem:[#allocation2] sm:$0xff]
      %v92 = vld [vmem:[#allocation2 + $0x8] sm:$0xff]
      %v93 = vadd.f32 %v91, %v92
      %94 = vadd.xlane.f32.xlu0 %v93
      %v95 = vpop.xlane.xlu0 %94
      %v96 = vrot.slane %v95, 4
      %v97 = vadd.f32 %v95, %v96
      %v98 = vrot.slane %v97, 2
      %v99 = vadd.f32 %v97, %v98
      %v100 = vrot.slane %v99, 1
      %v101 = vadd.f32 %v99, %v100
      %s102 = vtos %v101
      %v103 = vld [vmem:[#allocation3] sm:$0xff]
      %v104 = vld [vmem:[#allocation3 + $0x8] sm:$0xff]
      %v105 = vadd.f32 %v103, %v104
      %106 = vadd.xlane.f32.xlu0 %v105
      %v107 = vpop.xlane.xlu0 %106
      %v108 = vrot.slane %v107, 4
      %v109 = vadd.f32 %v107, %v108
      %v110 = vrot.slane %v109, 2
      %v111 = vadd.f32 %v109, %v110
      %v112 = vrot.slane %v111, 1
      %v113 = vadd.f32 %v111, %v112
      %s114 = vtos %v113
      %v115 = vlaneseq
      %v116 = vshrl.u32 %v115, 7
      %vm117 = vcmp.eq.s32.totalorder %v116, 0
      %vm118 = vcmp.eq.s32.totalorder %v116, 1
      %v119 = vstv %s114
      %v120 = vsel %vm118, %v119, 0.0
      %v121 = vstv %s102
      %v122 = vsel %vm117, %v121, %v120
      %123 = vst [vmem:[#allocation9] sm:$0xff] %v122
    $region25: #{tpu_custom_call.1} parent=1 // pred_fallthru
      _
    // Predicated region
    $region26: #{tpu_custom_call.1} parent=1 // pred_check
      _
    $region27: #{tpu_custom_call.1} parent=1 // pred_check_branch
      %125 = sbr.rel (0) target = $region29
    $region28: #{tpu_custom_call.1} parent=1 // pred_region
      %s127 = ssub.s32 128, 128
      %128 = vsyncadd [#allocation6], %s127
      %s130 = sshll.u32 [#allocation9], 4
      %s131 = int_to_ptr.vmem [resolvable:$true] %s130
      %133 = dma.vmem_to_hbm [thread:$0]  %s131, 128, %s2, [#allocation6]
    $region29: #{tpu_custom_call.1} parent=1 // pred_fallthru
      _
    // Predicated region
    $region30: #{tpu_custom_call.1} parent=1 // pred_check
      _
    $region31: #{tpu_custom_call.1} parent=1 // pred_check_branch
      %135 = sbr.rel (0) target = $region33
    $region32: #{tpu_custom_call.1} parent=1 // pred_region
      %136 = dma.done [#allocation6], 128
    $region33: #{tpu_custom_call.1} parent=1 // pred_fallthru
      _
    %137 = vsyncpa [#allocation5], 1
    %138 = vsyncpa [#allocation8], 1
    %139 = vsyncpa [#allocation6], 1

</llo_original>
